<compile_context>
chip_gen: v5e
topology: v5e:2x2
jax: 0.10.0
libtpu: 0.0.40
codegen_flags: <defaults>
</compile_context>

<pallas_src>
import functools

import jax
import jax.numpy as jnp
import numpy as np
from jax.experimental import pallas as pl
from jax.experimental.pallas import tpu as pltpu


def _cda_kernel(num_heads, use_heads, *refs):
    if use_heads:
        (x_ref, y_ref, wkv_ref, bkv_ref, wq_ref, bq_ref,
         wproj_ref, bproj_ref, tcol_ref, o_ref) = refs
        mask_ref = None
    else:
        (x_ref, y_ref, wkv_ref, bkv_ref, wq_ref, bq_ref,
         wproj_ref, bproj_ref, tcol_ref, mask_ref, o_ref) = refs

    batch_tile, dim, n = x_ref.shape
    c = dim // num_heads

    wkv = wkv_ref[...]            # (2D, D) bf16
    bkv = bkv_ref[...]            # (2D, 1) f32
    wq = wq_ref[...]              # (D, D) bf16
    bq = bq_ref[...]              # (D, 1) f32
    wproj = wproj_ref[...]        # (D, D) bf16
    bproj = bproj_ref[...]        # (D, 1) f32
    tcol = tcol_ref[...]          # (D, 1) f32 per-row (= per-head) temperature
    mask = None if use_heads else mask_ref[...]   # (D, D) f32: 0 in-head, -1e30 off-head

    for b in range(batch_tile):                   # small static batch tile
        xb = x_ref[b].astype(jnp.bfloat16)        # (D, N)
        yb = y_ref[b].astype(jnp.bfloat16)        # (D, N)

        # 1x1 Conv1d == channel matmul (bf16 MXU inputs, f32 accumulation).
        kv = jnp.dot(wkv, xb, preferred_element_type=jnp.float32) + bkv   # (2D, N) f32
        q = jnp.dot(wq, yb, preferred_element_type=jnp.float32) + bq      # (D, N) f32
        k = kv[:dim, :]
        v = kv[dim:, :].astype(jnp.bfloat16)      # cast once; reused by attn@V

        # F.normalize(dim=-1): x * rsqrt(max(sum x^2, eps^2)); temperature folded into q.
        qn = q * jax.lax.rsqrt(jnp.maximum(jnp.sum(q * q, -1, keepdims=True), 1e-24)) * tcol
        kn = k * jax.lax.rsqrt(jnp.maximum(jnp.sum(k * k, -1, keepdims=True), 1e-24))

        if use_heads:
            # Block-diagonal attention as a head-batched contraction (no masked overcompute).
            qh = qn.astype(jnp.bfloat16).reshape(num_heads, c, n)
            kh = kn.astype(jnp.bfloat16).reshape(num_heads, c, n)
            vh = v.reshape(num_heads, c, n)
            attn = jax.lax.dot_general(qh, kh, (((2,), (2,)), ((0,), (0,))),
                                       preferred_element_type=jnp.float32)   # (H, c, c)
            m = jnp.max(attn, axis=-1, keepdims=True)
            e = jnp.exp(attn - m)
            denom = jnp.sum(e, axis=-1, keepdims=True)                        # (H, c, 1)
            acc = jax.lax.dot_general(e.astype(jnp.bfloat16), vh,
                                      (((2,), (1,)), ((0,), (0,))),
                                      preferred_element_type=jnp.float32)     # (H, c, n)
            out_b = (acc * pl.reciprocal(denom, approx=True)).reshape(dim, n)
        else:
            # All heads in one (D,N)x(N,D) contraction; off-head blocks biased to -1e30 so
            # their exp() underflows to exactly 0 (keep the bias add in f32).
            attn = jax.lax.dot_general(qn.astype(jnp.bfloat16), kn.astype(jnp.bfloat16),
                                       (((1,), (1,)), ((), ())),
                                       preferred_element_type=jnp.float32) + mask
            m = jnp.max(attn, axis=-1, keepdims=True)
            e = jnp.exp(attn - m)
            denom = jnp.sum(e, axis=-1, keepdims=True)                        # (D, 1)
            acc = jnp.dot(e.astype(jnp.bfloat16), v,
                          preferred_element_type=jnp.float32)                 # (D, N)
            out_b = acc * pl.reciprocal(denom, approx=True)   # normalize after attn@V

        # Output projection + store for this batch slice only (f32 to match the module).
        o_ref[b] = jnp.dot(wproj, out_b.astype(jnp.bfloat16),
                           preferred_element_type=jnp.float32) + bproj


def _vmem_budget_bytes():
    # Generation-aware VMEM sizing: v5e/v6e have 128 MiB physical VMEM, v7x only 64 MiB.
    try:
        cap = int(pltpu.get_tpu_info().vmem_capacity_bytes)
    except Exception:
        cap = 64 * 1024 * 1024          # conservative (v7x-sized) fallback
    limit = min(int(0.75 * cap), 100 * 1024 * 1024)   # scoped VMEM limit for the kernel
    budget = int(0.6 * limit)                         # headroom for blocks + temporaries
    return budget, limit


def _pick_batch_tile(batch, dim, seq, num_heads, use_heads, budget):
    # Keep grid length >= 2 whenever batch allows (v7x has 2 TensorCores; also preserves
    # DMA/compute pipeline overlap); within that, pick the largest tile that fits VMEM.
    cap = max(1, batch // 2) if batch >= 2 else 1
    candidates = [tb for tb in range(1, cap + 1) if batch % tb == 0]
    c = dim // num_heads
    attn_elems = num_heads * c * c if use_heads else dim * dim
    # Constants (double-buffered): wkv/wq/wproj bf16 (+ f32 mask for the masked path) + biases.
    const_bytes = 2 * (8 * dim * dim + (0 if use_heads else 4 * dim * dim) + 32 * dim)
    # Per-batch-slice f32 temporaries (kv, q, qn, kn, acc, out_b, proj) + attn/e, with 2x slop.
    temp_bytes = 2 * (32 * dim * seq + 8 * attn_elems)
    for tb in sorted(candidates, reverse=True):
        act_bytes = 2 * 3 * (tb * dim * seq * 4)      # x, y, out blocks, double-buffered
        if act_bytes + const_bytes + temp_bytes <= budget:
            return tb
    return 1


def cda_attention(x, y, w_kv, b_kv, w_q, b_q, w_proj, b_proj, temperature, num_heads,
                  batch_tile=None, attention_mode=None):
    B, D, N = x.shape
    assert D % num_heads == 0
    c = D // num_heads
    if attention_mode is None:
        # Head-batched block-diagonal math once head_dim fills an MXU tile; the masked
        # full-(D,D) formulation keeps the MXU dense for small head dims.
        attention_mode = "heads" if c >= 128 else "masked"
    use_heads = attention_mode == "heads"

    budget, vmem_limit = _vmem_budget_bytes()
    if batch_tile is None:
        batch_tile = _pick_batch_tile(B, D, N, num_heads, use_heads, budget)
    assert B % batch_tile == 0

    x = x.astype(jnp.float32)
    y = y.astype(jnp.float32)
    wkv = w_kv.astype(jnp.bfloat16)
    wq = w_q.astype(jnp.bfloat16)
    wp = w_proj.astype(jnp.bfloat16)
    bkv = b_kv.reshape(2 * D, 1).astype(jnp.float32)
    bq = b_q.reshape(D, 1).astype(jnp.float32)
    bp = b_proj.reshape(D, 1).astype(jnp.float32)
    # Per-head temperature expanded to one scale per channel row (folded into q in-kernel).
    tcol = jnp.repeat(temperature.reshape(num_heads), c).reshape(D, 1).astype(jnp.float32)

    act_spec = pl.BlockSpec((batch_tile, D, N), lambda i: (i, 0, 0))
    in_specs = [
        act_spec,                                        # x (B, D, N) f32
        act_spec,                                        # y (B, D, N) f32
        pl.BlockSpec((2 * D, D), lambda i: (0, 0)),      # kv weight (bf16)
        pl.BlockSpec((2 * D, 1), lambda i: (0, 0)),      # kv bias (f32 column)
        pl.BlockSpec((D, D), lambda i: (0, 0)),          # q weight
        pl.BlockSpec((D, 1), lambda i: (0, 0)),          # q bias
        pl.BlockSpec((D, D), lambda i: (0, 0)),          # project_out weight
        pl.BlockSpec((D, 1), lambda i: (0, 0)),          # project_out bias
        pl.BlockSpec((D, 1), lambda i: (0, 0)),          # temperature column
    ]
    args = [x, y, wkv, bkv, wq, bq, wp, bp, tcol]
    if not use_heads:
        # Same-head additive mask precomputed once (0 in-head, -1e30 off-head).
        rows = jnp.arange(D, dtype=jnp.int32) // c
        mask = jnp.where(rows[:, None] == rows[None, :], 0.0, -1e30).astype(jnp.float32)
        in_specs.append(pl.BlockSpec((D, D), lambda i: (0, 0)))
        args.append(mask)

    kernel = functools.partial(_cda_kernel, num_heads, use_heads)

    out = pl.pallas_call(
        kernel,
        out_shape=jax.ShapeDtypeStruct((B, D, N), jnp.float32),
        grid=(B // batch_tile,),
        in_specs=in_specs,
        out_specs=pl.BlockSpec((batch_tile, D, N), lambda i: (i, 0, 0)),
        compiler_params=pltpu.CompilerParams(
            dimension_semantics=("parallel",),
            vmem_limit_bytes=vmem_limit),
    )(*args)
    return out


def cda_attention_reference(x, y, w_kv, b_kv, w_q, b_q, w_proj, b_proj, temperature, num_heads):
    # Pure-JAX f32 reference mirroring the PyTorch forward.
    B, D, N = x.shape
    c = D // num_heads
    kv = jnp.einsum('oi,bin->bon', w_kv, x) + b_kv[None, :, None]
    k, v = kv[:, :D], kv[:, D:]
    q = jnp.einsum('oi,bin->bon', w_q, y) + b_q[None, :, None]
    q, k, v = (t.reshape(B, num_heads, c, N) for t in (q, k, v))
    qn = q / jnp.maximum(jnp.sqrt(jnp.sum(q * q, axis=-1, keepdims=True)), 1e-12)
    kn = k / jnp.maximum(jnp.sqrt(jnp.sum(k * k, axis=-1, keepdims=True)), 1e-12)
    attn = jnp.einsum('bhcn,bhdn->bhcd', qn, kn) * temperature[None]
    attn = jax.nn.softmax(attn, axis=-1)
    out = jnp.einsum('bhcd,bhdn->bhcn', attn, v).reshape(B, D, N)
    return jnp.einsum('oi,bin->bon', w_proj, out) + b_proj[None, :, None]


if __name__ == "__main__":
    def _run_case(key, B, D, H, N):
        ks = jax.random.split(key, 9)
        x = jax.random.normal(ks[0], (B, D, N), jnp.float32)
        y = jax.random.normal(ks[1], (B, D, N), jnp.float32)
        # Conv1d(kernel_size=1) weights (out, in) and biases (out,).
        w_kv = jax.random.normal(ks[2], (2 * D, D), jnp.float32) * 0.1
        b_kv = jax.random.normal(ks[3], (2 * D,), jnp.float32) * 0.1
        w_q = jax.random.normal(ks[4], (D, D), jnp.float32) * 0.1
        b_q = jax.random.normal(ks[5], (D,), jnp.float32) * 0.1
        w_proj = jax.random.normal(ks[6], (D, D), jnp.float32) * 0.1
        b_proj = jax.random.normal(ks[7], (D,), jnp.float32) * 0.1
        # nn.Parameter(torch.ones(H,1,1)) in __init__; randomized to exercise the scaling path.
        temperature = jax.random.uniform(ks[8], (H, 1, 1), jnp.float32, minval=0.5, maxval=1.5)

        out = cda_attention(x, y, w_kv, b_kv, w_q, b_q, w_proj, b_proj, temperature, H)
        out = jax.block_until_ready(out)
        ref = cda_attention_reference(x, y, w_kv, b_kv, w_q, b_q, w_proj, b_proj, temperature, H)
        assert out.shape == (B, D, N)
        # bf16 MXU inputs (f32 accumulation) introduce ~1e-3-level error vs the pure-f32 reference.
        assert np.allclose(np.asarray(out), np.asarray(ref), atol=2e-2, rtol=2e-2), \
            f"mismatch vs JAX reference (B={B}, D={D}, H={H}, N={N})"

    key = jax.random.PRNGKey(0)
    k1, k2 = jax.random.split(key)
    _run_case(k1, B=2, D=32, H=4, N=16)     # batch_tile=1, grid=(2,)
    _run_case(k2, B=4, D=64, H=2, N=32)     # batch_tile=2, grid=(2,) — exercises tile > 1

    print("KERNEL_OK")
</pallas_src>

<mosaic_0001>
module attributes {stable_mosaic.version = 11 : i64} {
  func.func @_cda_kernel(%arg0: i32, %arg1: memref<1x32x16xf32, #tpu.memory_space<vmem>>, %arg2: memref<1x32x16xf32, #tpu.memory_space<vmem>>, %arg3: memref<64x32xbf16, #tpu.memory_space<vmem>>, %arg4: memref<64x1xf32, #tpu.memory_space<vmem>>, %arg5: memref<32x32xbf16, #tpu.memory_space<vmem>>, %arg6: memref<32x1xf32, #tpu.memory_space<vmem>>, %arg7: memref<32x32xbf16, #tpu.memory_space<vmem>>, %arg8: memref<32x1xf32, #tpu.memory_space<vmem>>, %arg9: memref<32x1xf32, #tpu.memory_space<vmem>>, %arg10: memref<32x32xf32, #tpu.memory_space<vmem>>, %arg11: memref<1x32x16xf32, #tpu.memory_space<vmem>>) attributes {dimension_semantics = [#tpu.dimension_semantics<parallel>], iteration_bounds = array<i64: 2>, scalar_prefetch = 0 : i64, scratch_operands = 0 : i64, tpu.core_type = #tpu.core_type<tc>, window_params = [{transform_indices = @transform_0, window_bounds = array<i64: 1, 32, 16>}, {transform_indices = @transform_1, window_bounds = array<i64: 1, 32, 16>}, {pipeline_mode = #tpu.pipeline_mode<synchronous>, transform_indices = @transform_2, window_bounds = array<i64: 64, 32>}, {pipeline_mode = #tpu.pipeline_mode<synchronous>, transform_indices = @transform_3, window_bounds = array<i64: 64, 1>}, {pipeline_mode = #tpu.pipeline_mode<synchronous>, transform_indices = @transform_4, window_bounds = array<i64: 32, 32>}, {pipeline_mode = #tpu.pipeline_mode<synchronous>, transform_indices = @transform_5, window_bounds = array<i64: 32, 1>}, {pipeline_mode = #tpu.pipeline_mode<synchronous>, transform_indices = @transform_6, window_bounds = array<i64: 32, 32>}, {pipeline_mode = #tpu.pipeline_mode<synchronous>, transform_indices = @transform_7, window_bounds = array<i64: 32, 1>}, {pipeline_mode = #tpu.pipeline_mode<synchronous>, transform_indices = @transform_8, window_bounds = array<i64: 32, 1>}, {pipeline_mode = #tpu.pipeline_mode<synchronous>, transform_indices = @transform_9, window_bounds = array<i64: 32, 32>}, {transform_indices = @transform_10, window_bounds = array<i64: 1, 32, 16>}]} {
    %c0 = arith.constant 0 : index
    %c0_0 = arith.constant 0 : index
    %0 = vector.load %arg3[%c0, %c0_0] : memref<64x32xbf16, #tpu.memory_space<vmem>>, vector<64x32xbf16>
    %c0_1 = arith.constant 0 : index
    %c0_2 = arith.constant 0 : index
    %1 = vector.load %arg4[%c0_1, %c0_2] : memref<64x1xf32, #tpu.memory_space<vmem>>, vector<64x1xf32>
    %c0_3 = arith.constant 0 : index
    %c0_4 = arith.constant 0 : index
    %2 = vector.load %arg5[%c0_3, %c0_4] : memref<32x32xbf16, #tpu.memory_space<vmem>>, vector<32x32xbf16>
    %c0_5 = arith.constant 0 : index
    %c0_6 = arith.constant 0 : index
    %3 = vector.load %arg6[%c0_5, %c0_6] : memref<32x1xf32, #tpu.memory_space<vmem>>, vector<32x1xf32>
    %c0_7 = arith.constant 0 : index
    %c0_8 = arith.constant 0 : index
    %4 = vector.load %arg7[%c0_7, %c0_8] : memref<32x32xbf16, #tpu.memory_space<vmem>>, vector<32x32xbf16>
    %c0_9 = arith.constant 0 : index
    %c0_10 = arith.constant 0 : index
    %5 = vector.load %arg8[%c0_9, %c0_10] : memref<32x1xf32, #tpu.memory_space<vmem>>, vector<32x1xf32>
    %c0_11 = arith.constant 0 : index
    %c0_12 = arith.constant 0 : index
    %6 = vector.load %arg9[%c0_11, %c0_12] : memref<32x1xf32, #tpu.memory_space<vmem>>, vector<32x1xf32>
    %c0_13 = arith.constant 0 : index
    %c0_14 = arith.constant 0 : index
    %7 = vector.load %arg10[%c0_13, %c0_14] : memref<32x32xf32, #tpu.memory_space<vmem>>, vector<32x32xf32>
    %c0_15 = arith.constant 0 : index
    %c0_16 = arith.constant 0 : index
    %c0_17 = arith.constant 0 : index
    %8 = vector.load %arg1[%c0_15, %c0_16, %c0_17] : memref<1x32x16xf32, #tpu.memory_space<vmem>>, vector<1x32x16xf32>
    %9 = vector.shape_cast %8 : vector<1x32x16xf32> to vector<32x16xf32>
    %10 = arith.truncf %9 : vector<32x16xf32> to vector<32x16xbf16>
    %c0_18 = arith.constant 0 : index
    %c0_19 = arith.constant 0 : index
    %c0_20 = arith.constant 0 : index
    %11 = vector.load %arg2[%c0_18, %c0_19, %c0_20] : memref<1x32x16xf32, #tpu.memory_space<vmem>>, vector<1x32x16xf32>
    %12 = vector.shape_cast %11 : vector<1x32x16xf32> to vector<32x16xf32>
    %13 = arith.truncf %12 : vector<32x16xf32> to vector<32x16xbf16>
    %cst = arith.constant dense<0.000000e+00> : vector<64x16xf32>
    %14 = tpu.matmul %0, %10, %cst {dimension_numbers = #tpu.dot_dimension_numbers<[1], [0], [0], [1], [0, 0, 1, 1], [], []>} : vector<64x32xbf16>, vector<32x16xbf16>, vector<64x16xf32> -> vector<64x16xf32>
    %15 = vector.broadcast %1 : vector<64x1xf32> to vector<64x16xf32>
    %16 = arith.addf %14, %15 : vector<64x16xf32>
    %cst_21 = arith.constant dense<0.000000e+00> : vector<32x16xf32>
    %17 = tpu.matmul %2, %13, %cst_21 {dimension_numbers = #tpu.dot_dimension_numbers<[1], [0], [0], [1], [0, 0, 1, 1], [], []>} : vector<32x32xbf16>, vector<32x16xbf16>, vector<32x16xf32> -> vector<32x16xf32>
    %18 = vector.broadcast %3 : vector<32x1xf32> to vector<32x16xf32>
    %19 = arith.addf %17, %18 : vector<32x16xf32>
    %20 = vector.extract_strided_slice %16 {offsets = [0, 0], sizes = [32, 16], strides = [1, 1]} : vector<64x16xf32> to vector<32x16xf32>
    %21 = vector.extract_strided_slice %16 {offsets = [32, 0], sizes = [32, 16], strides = [1, 1]} : vector<64x16xf32> to vector<32x16xf32>
    %22 = arith.truncf %21 : vector<32x16xf32> to vector<32x16xbf16>
    %23 = arith.mulf %19, %19 : vector<32x16xf32>
    %cst_22 = arith.constant dense<0.000000e+00> : vector<32xf32>
    %24 = vector.multi_reduction <add>, %23, %cst_22 [1] : vector<32x16xf32> to vector<32xf32>
    %25 = vector.shape_cast %24 : vector<32xf32> to vector<32x1xf32>
    %cst_23 = arith.constant 1.000000e-24 : f32
    %26 = vector.broadcast %cst_23 : f32 to vector<32x1xf32>
    %27 = arith.maximumf %25, %26 : vector<32x1xf32>
    %28 = math.rsqrt %27 : vector<32x1xf32>
    %29 = vector.broadcast %28 : vector<32x1xf32> to vector<32x16xf32>
    %30 = arith.mulf %19, %29 : vector<32x16xf32>
    %31 = vector.broadcast %6 : vector<32x1xf32> to vector<32x16xf32>
    %32 = arith.mulf %30, %31 : vector<32x16xf32>
    %33 = arith.mulf %20, %20 : vector<32x16xf32>
    %cst_24 = arith.constant dense<0.000000e+00> : vector<32xf32>
    %34 = vector.multi_reduction <add>, %33, %cst_24 [1] : vector<32x16xf32> to vector<32xf32>
    %35 = vector.shape_cast %34 : vector<32xf32> to vector<32x1xf32>
    %cst_25 = arith.constant 1.000000e-24 : f32
    %36 = vector.broadcast %cst_25 : f32 to vector<32x1xf32>
    %37 = arith.maximumf %35, %36 : vector<32x1xf32>
    %38 = math.rsqrt %37 : vector<32x1xf32>
    %39 = vector.broadcast %38 : vector<32x1xf32> to vector<32x16xf32>
    %40 = arith.mulf %20, %39 : vector<32x16xf32>
    %41 = arith.truncf %32 : vector<32x16xf32> to vector<32x16xbf16>
    %42 = arith.truncf %40 : vector<32x16xf32> to vector<32x16xbf16>
    %cst_26 = arith.constant dense<0.000000e+00> : vector<32x32xf32>
    %43 = tpu.matmul %41, %42, %cst_26 {dimension_numbers = #tpu.dot_dimension_numbers<[1], [1], [0], [0], [0, 0, 1, 0], [], []>} : vector<32x16xbf16>, vector<32x16xbf16>, vector<32x32xf32> -> vector<32x32xf32>
    %44 = arith.addf %43, %7 : vector<32x32xf32>
    %cst_27 = arith.constant dense<0xFF800000> : vector<32xf32>
    %45 = vector.multi_reduction <maximumf>, %44, %cst_27 [1] : vector<32x32xf32> to vector<32xf32>
    %46 = vector.shape_cast %45 : vector<32xf32> to vector<32x1xf32>
    %47 = vector.broadcast %46 : vector<32x1xf32> to vector<32x32xf32>
    %48 = arith.subf %44, %47 : vector<32x32xf32>
    %49 = math.exp %48 : vector<32x32xf32>
    %cst_28 = arith.constant dense<0.000000e+00> : vector<32xf32>
    %50 = vector.multi_reduction <add>, %49, %cst_28 [1] : vector<32x32xf32> to vector<32xf32>
    %51 = vector.shape_cast %50 : vector<32xf32> to vector<32x1xf32>
    %52 = arith.truncf %49 : vector<32x32xf32> to vector<32x32xbf16>
    %cst_29 = arith.constant dense<0.000000e+00> : vector<32x16xf32>
    %53 = tpu.matmul %52, %22, %cst_29 {dimension_numbers = #tpu.dot_dimension_numbers<[1], [0], [0], [1], [0, 0, 1, 1], [], []>} : vector<32x32xbf16>, vector<32x16xbf16>, vector<32x16xf32> -> vector<32x16xf32>
    %54 = tpu.reciprocal %51 {approx = true} : vector<32x1xf32> -> vector<32x1xf32>
    %55 = vector.broadcast %54 : vector<32x1xf32> to vector<32x16xf32>
    %56 = arith.mulf %53, %55 : vector<32x16xf32>
    %57 = arith.truncf %56 : vector<32x16xf32> to vector<32x16xbf16>
    %cst_30 = arith.constant dense<0.000000e+00> : vector<32x16xf32>
    %58 = tpu.matmul %4, %57, %cst_30 {dimension_numbers = #tpu.dot_dimension_numbers<[1], [0], [0], [1], [0, 0, 1, 1], [], []>} : vector<32x32xbf16>, vector<32x16xbf16>, vector<32x16xf32> -> vector<32x16xf32>
    %59 = vector.broadcast %5 : vector<32x1xf32> to vector<32x16xf32>
    %60 = arith.addf %58, %59 : vector<32x16xf32>
    %c0_31 = arith.constant 0 : index
    %c0_32 = arith.constant 0 : index
    %c0_33 = arith.constant 0 : index
    %61 = vector.load %arg11[%c0_31, %c0_32, %c0_33] : memref<1x32x16xf32, #tpu.memory_space<vmem>>, vector<1x32x16xf32>
    %62 = vector.shape_cast %61 : vector<1x32x16xf32> to vector<32x16xf32>
    %63 = vector.shape_cast %60 : vector<32x16xf32> to vector<1x32x16xf32>
    tpu.vector_store %arg11[%c0_31, %c0_32, %c0_33], %63 {strides = array<i32>} : memref<1x32x16xf32, #tpu.memory_space<vmem>>, vector<1x32x16xf32>,
    return
  }
  func.func @transform_0(%arg0: i32) -> (i32, i32, i32) {
    %c0_i32 = arith.constant 0 : i32
    %c0_i32_0 = arith.constant 0 : i32
    %c0_i32_1 = arith.constant 0 : i32
    return %arg0, %c0_i32, %c0_i32_0 : i32, i32, i32
  }
  func.func @transform_1(%arg0: i32) -> (i32, i32, i32) {
    %c0_i32 = arith.constant 0 : i32
    %c0_i32_0 = arith.constant 0 : i32
    %c0_i32_1 = arith.constant 0 : i32
    return %arg0, %c0_i32, %c0_i32_0 : i32, i32, i32
  }
  func.func @transform_2(%arg0: i32) -> (i32, i32) {
    %c0_i32 = arith.constant 0 : i32
    %c0_i32_0 = arith.constant 0 : i32
    %c0_i32_1 = arith.constant 0 : i32
    return %c0_i32, %c0_i32_0 : i32, i32
  }
  func.func @transform_3(%arg0: i32) -> (i32, i32) {
    %c0_i32 = arith.constant 0 : i32
    %c0_i32_0 = arith.constant 0 : i32
    %c0_i32_1 = arith.constant 0 : i32
    return %c0_i32, %c0_i32_0 : i32, i32
  }
  func.func @transform_4(%arg0: i32) -> (i32, i32) {
    %c0_i32 = arith.constant 0 : i32
    %c0_i32_0 = arith.constant 0 : i32
    %c0_i32_1 = arith.constant 0 : i32
    return %c0_i32, %c0_i32_0 : i32, i32
  }
  func.func @transform_5(%arg0: i32) -> (i32, i32) {
    %c0_i32 = arith.constant 0 : i32
    %c0_i32_0 = arith.constant 0 : i32
    %c0_i32_1 = arith.constant 0 : i32
    return %c0_i32, %c0_i32_0 : i32, i32
  }
  func.func @transform_6(%arg0: i32) -> (i32, i32) {
    %c0_i32 = arith.constant 0 : i32
    %c0_i32_0 = arith.constant 0 : i32
    %c0_i32_1 = arith.constant 0 : i32
    return %c0_i32, %c0_i32_0 : i32, i32
  }
  func.func @transform_7(%arg0: i32) -> (i32, i32) {
    %c0_i32 = arith.constant 0 : i32
    %c0_i32_0 = arith.constant 0 : i32
    %c0_i32_1 = arith.constant 0 : i32
    return %c0_i32, %c0_i32_0 : i32, i32
  }
  func.func @transform_8(%arg0: i32) -> (i32, i32) {
    %c0_i32 = arith.constant 0 : i32
    %c0_i32_0 = arith.constant 0 : i32
    %c0_i32_1 = arith.constant 0 : i32
    return %c0_i32, %c0_i32_0 : i32, i32
  }
  func.func @transform_9(%arg0: i32) -> (i32, i32) {
    %c0_i32 = arith.constant 0 : i32
    %c0_i32_0 = arith.constant 0 : i32
    %c0_i32_1 = arith.constant 0 : i32
    return %c0_i32, %c0_i32_0 : i32, i32
  }
  func.func @transform_10(%arg0: i32) -> (i32, i32, i32) {
    %c0_i32 = arith.constant 0 : i32
    %c0_i32_0 = arith.constant 0 : i32
    %c0_i32_1 = arith.constant 0 : i32
    return %arg0, %c0_i32, %c0_i32_0 : i32, i32, i32
  }
}

</mosaic_0001>

<llo_original>
// kernel: tpu_custom_call.1
$region0: #{tpu_custom_call.1}
  #allocation0 [shape = 'u32[]', space=smem, size = 0x4, offset = 0x4, fixed_abs, tag = 'smem constant byte address 0x4 - core index']
  #allocation1 [shape = 'u32[72,128]{1,0:T(1,128)}', space=vmem, size = 0x9000, scoped, tag = 'internal scratch']
  %s0 = inlined_call_operand.vmem [shape: f32[2,32,16], index: 0, kind: input, shape index: {}]
  %s1 = inlined_call_operand.vmem [shape: f32[2,32,16], index: 1, kind: input, shape index: {}]
  %s2 = inlined_call_operand.vmem [shape: bf16[64,32], index: 2, kind: input, shape index: {}]
  %s3 = inlined_call_operand.vmem [shape: f32[64,1], index: 3, kind: input, shape index: {}]
  %s4 = inlined_call_operand.vmem [shape: bf16[32,32], index: 4, kind: input, shape index: {}]
  %s5 = inlined_call_operand.vmem [shape: f32[32,1], index: 5, kind: input, shape index: {}]
  %s6 = inlined_call_operand.vmem [shape: bf16[32,32], index: 6, kind: input, shape index: {}]
  %s7 = inlined_call_operand.vmem [shape: f32[32,1], index: 7, kind: input, shape index: {}]
  %s8 = inlined_call_operand.vmem [shape: f32[32,1], index: 8, kind: input, shape index: {}]
  %s9 = inlined_call_operand.vmem [shape: f32[32,32], index: 9, kind: input, shape index: {}]
  %s10 = inlined_call_operand.vmem [shape: f32[2,32,16], index: 10, kind: output, shape index: {}]
  %s11 = sld [smem:[#allocation0]]
  $region73: #{tpu_custom_call.1} parent=0
    _
  %s13 = ssub.s32 1, %s11
  %s14 = scalar_select 0, %s13, %s11
  loop: start=0, step=1, limit=4
  $region2: #{tpu_custom_call.1} parent=0 // loop_pre_header
    _
  $region3: #{tpu_custom_call.1} parent=0 // loop_header
    %s16 = sphi 0, %s20
    %p17 = scmp.ge.s32.totalorder %s16, 4
    %s26 = sphi 0, %s28
    %s29 = sphi 0, %s26
    %s30 = sphi 0, %s29
    %s46 = sphi 0, %s30
    %s52 = sphi 0, %s54
    %s55 = sphi 0, %s52
    %s56 = sphi 0, %s55
    %s72 = sphi 0, %s56
    %s76 = sphi 0, %s76
    %s78 = sphi 0, %s76
    %s79 = sphi 0, %s78
    %s93 = sphi 0, %s79
    %s97 = sphi 0, %s97
    %s99 = sphi 0, %s97
    %s100 = sphi 0, %s99
    %s114 = sphi 0, %s100
    %s118 = sphi 0, %s118
    %s120 = sphi 0, %s118
    %s121 = sphi 0, %s120
    %s135 = sphi 0, %s121
    %s139 = sphi 0, %s139
    %s141 = sphi 0, %s139
    %s142 = sphi 0, %s141
    %s156 = sphi 0, %s142
    %s160 = sphi 0, %s160
    %s162 = sphi 0, %s160
    %s163 = sphi 0, %s162
    %s177 = sphi 0, %s163
    %s181 = sphi 0, %s181
    %s183 = sphi 0, %s181
    %s184 = sphi 0, %s183
    %s198 = sphi 0, %s184
    %s202 = sphi 0, %s202
    %s204 = sphi 0, %s202
    %s205 = sphi 0, %s204
    %s219 = sphi 0, %s205
    %s223 = sphi 0, %s223
    %s225 = sphi 0, %s223
    %s226 = sphi 0, %s225
    %s240 = sphi 0, %s226
    %s246 = sphi 0, %s248
    %s249 = sphi 0, %s246
    %s250 = sphi 0, %s249
    %s266 = sphi 0, %s250
  $region4: #{tpu_custom_call.1} parent=0 // loop_header_branch
    %19 = sbr.rel (%p17) target = $region8
  $region5: #{tpu_custom_call.1} parent=0 // loop_body
    %s21 = ssub.s32 %s16, 1
    %s22 = ssub.s32 %s16, 2
    %s23 = sadd.s32 %s16, 1
    %s24 = ssub.s32 %s16, %s23
    %p25 = scmp.eq.s32.totalorder %s24, 0
    %s27 = sadd.s32 %s26, 1
    %s28 = scalar_select %p25, %s26, %s27
    %p31 = pneg %p25
    %p32 = scmp.eq.s32.totalorder %s16, 1
    %p33 = por %p31, %p32
    %p34 = scmp.ne.s32.totalorder %s26, %s29
    %p35 = scmp.eq.s32.totalorder %s16, 0
    %p36 = por %p34, %p35
    %p37 = scmp.ne.s32.totalorder %s26, %s29
    %p38 = scmp.eq.s32.totalorder %s21, 1
    %p39 = por %p37, %p38
    %p40 = scmp.ne.s32.totalorder %s29, %s30
    %p41 = scmp.eq.s32.totalorder %s21, 0
    %p42 = por %p40, %p41
    %p43 = scmp.ne.s32.totalorder %s29, %s30
    %p44 = scmp.eq.s32.totalorder %s22, 1
    %p45 = por %p43, %p44
    %p47 = scmp.ne.s32.totalorder %s30, %s46
    %p48 = scmp.eq.s32.totalorder %s22, 0
    %p49 = por %p47, %p48
    %s50 = ssub.s32 %s16, %s23
    %p51 = scmp.eq.s32.totalorder %s50, 0
    %s53 = sadd.s32 %s52, 1
    %s54 = scalar_select %p51, %s52, %s53
    %p57 = pneg %p51
    %p58 = scmp.eq.s32.totalorder %s16, 1
    %p59 = por %p57, %p58
    %p60 = scmp.ne.s32.totalorder %s52, %s55
    %p61 = scmp.eq.s32.totalorder %s16, 0
    %p62 = por %p60, %p61
    %p63 = scmp.ne.s32.totalorder %s52, %s55
    %p64 = scmp.eq.s32.totalorder %s21, 1
    %p65 = por %p63, %p64
    %p66 = scmp.ne.s32.totalorder %s55, %s56
    %p67 = scmp.eq.s32.totalorder %s21, 0
    %p68 = por %p66, %p67
    %p69 = scmp.ne.s32.totalorder %s55, %s56
    %p70 = scmp.eq.s32.totalorder %s22, 1
    %p71 = por %p69, %p70
    %p73 = scmp.ne.s32.totalorder %s56, %s72
    %p74 = scmp.eq.s32.totalorder %s22, 0
    %p75 = por %p73, %p74
    %s77 = sadd.s32 %s76, 1
    %p80 = scmp.eq.s32.totalorder %s16, 1
    %p81 = scmp.ne.s32.totalorder %s76, %s78
    %p82 = scmp.eq.s32.totalorder %s16, 0
    %p83 = por %p81, %p82
    %p84 = scmp.ne.s32.totalorder %s76, %s78
    %p85 = scmp.eq.s32.totalorder %s21, 1
    %p86 = por %p84, %p85
    %p87 = scmp.ne.s32.totalorder %s78, %s79
    %p88 = scmp.eq.s32.totalorder %s21, 0
    %p89 = por %p87, %p88
    %p90 = scmp.ne.s32.totalorder %s78, %s79
    %p91 = scmp.eq.s32.totalorder %s22, 1
    %p92 = por %p90, %p91
    %p94 = scmp.ne.s32.totalorder %s79, %s93
    %p95 = scmp.eq.s32.totalorder %s22, 0
    %p96 = por %p94, %p95
    %s98 = sadd.s32 %s97, 1
    %p101 = scmp.eq.s32.totalorder %s16, 1
    %p102 = scmp.ne.s32.totalorder %s97, %s99
    %p103 = scmp.eq.s32.totalorder %s16, 0
    %p104 = por %p102, %p103
    %p105 = scmp.ne.s32.totalorder %s97, %s99
    %p106 = scmp.eq.s32.totalorder %s21, 1
    %p107 = por %p105, %p106
    %p108 = scmp.ne.s32.totalorder %s99, %s100
    %p109 = scmp.eq.s32.totalorder %s21, 0
    %p110 = por %p108, %p109
    %p111 = scmp.ne.s32.totalorder %s99, %s100
    %p112 = scmp.eq.s32.totalorder %s22, 1
    %p113 = por %p111, %p112
    %p115 = scmp.ne.s32.totalorder %s100, %s114
    %p116 = scmp.eq.s32.totalorder %s22, 0
    %p117 = por %p115, %p116
    %s119 = sadd.s32 %s118, 1
    %p122 = scmp.eq.s32.totalorder %s16, 1
    %p123 = scmp.ne.s32.totalorder %s118, %s120
    %p124 = scmp.eq.s32.totalorder %s16, 0
    %p125 = por %p123, %p124
    %p126 = scmp.ne.s32.totalorder %s118, %s120
    %p127 = scmp.eq.s32.totalorder %s21, 1
    %p128 = por %p126, %p127
    %p129 = scmp.ne.s32.totalorder %s120, %s121
    %p130 = scmp.eq.s32.totalorder %s21, 0
    %p131 = por %p129, %p130
    %p132 = scmp.ne.s32.totalorder %s120, %s121
    %p133 = scmp.eq.s32.totalorder %s22, 1
    %p134 = por %p132, %p133
    %p136 = scmp.ne.s32.totalorder %s121, %s135
    %p137 = scmp.eq.s32.totalorder %s22, 0
    %p138 = por %p136, %p137
    %s140 = sadd.s32 %s139, 1
    %p143 = scmp.eq.s32.totalorder %s16, 1
    %p144 = scmp.ne.s32.totalorder %s139, %s141
    %p145 = scmp.eq.s32.totalorder %s16, 0
    %p146 = por %p144, %p145
    %p147 = scmp.ne.s32.totalorder %s139, %s141
    %p148 = scmp.eq.s32.totalorder %s21, 1
    %p149 = por %p147, %p148
    %p150 = scmp.ne.s32.totalorder %s141, %s142
    %p151 = scmp.eq.s32.totalorder %s21, 0
    %p152 = por %p150, %p151
    %p153 = scmp.ne.s32.totalorder %s141, %s142
    %p154 = scmp.eq.s32.totalorder %s22, 1
    %p155 = por %p153, %p154
    %p157 = scmp.ne.s32.totalorder %s142, %s156
    %p158 = scmp.eq.s32.totalorder %s22, 0
    %p159 = por %p157, %p158
    %s161 = sadd.s32 %s160, 1
    %p164 = scmp.eq.s32.totalorder %s16, 1
    %p165 = scmp.ne.s32.totalorder %s160, %s162
    %p166 = scmp.eq.s32.totalorder %s16, 0
    %p167 = por %p165, %p166
    %p168 = scmp.ne.s32.totalorder %s160, %s162
    %p169 = scmp.eq.s32.totalorder %s21, 1
    %p170 = por %p168, %p169
    %p171 = scmp.ne.s32.totalorder %s162, %s163
    %p172 = scmp.eq.s32.totalorder %s21, 0
    %p173 = por %p171, %p172
    %p174 = scmp.ne.s32.totalorder %s162, %s163
    %p175 = scmp.eq.s32.totalorder %s22, 1
    %p176 = por %p174, %p175
    %p178 = scmp.ne.s32.totalorder %s163, %s177
    %p179 = scmp.eq.s32.totalorder %s22, 0
    %p180 = por %p178, %p179
    %s182 = sadd.s32 %s181, 1
    %p185 = scmp.eq.s32.totalorder %s16, 1
    %p186 = scmp.ne.s32.totalorder %s181, %s183
    %p187 = scmp.eq.s32.totalorder %s16, 0
    %p188 = por %p186, %p187
    %p189 = scmp.ne.s32.totalorder %s181, %s183
    %p190 = scmp.eq.s32.totalorder %s21, 1
    %p191 = por %p189, %p190
    %p192 = scmp.ne.s32.totalorder %s183, %s184
    %p193 = scmp.eq.s32.totalorder %s21, 0
    %p194 = por %p192, %p193
    %p195 = scmp.ne.s32.totalorder %s183, %s184
    %p196 = scmp.eq.s32.totalorder %s22, 1
    %p197 = por %p195, %p196
    %p199 = scmp.ne.s32.totalorder %s184, %s198
    %p200 = scmp.eq.s32.totalorder %s22, 0
    %p201 = por %p199, %p200
    %s203 = sadd.s32 %s202, 1
    %p206 = scmp.eq.s32.totalorder %s16, 1
    %p207 = scmp.ne.s32.totalorder %s202, %s204
    %p208 = scmp.eq.s32.totalorder %s16, 0
    %p209 = por %p207, %p208
    %p210 = scmp.ne.s32.totalorder %s202, %s204
    %p211 = scmp.eq.s32.totalorder %s21, 1
    %p212 = por %p210, %p211
    %p213 = scmp.ne.s32.totalorder %s204, %s205
    %p214 = scmp.eq.s32.totalorder %s21, 0
    %p215 = por %p213, %p214
    %p216 = scmp.ne.s32.totalorder %s204, %s205
    %p217 = scmp.eq.s32.totalorder %s22, 1
    %p218 = por %p216, %p217
    %p220 = scmp.ne.s32.totalorder %s205, %s219
    %p221 = scmp.eq.s32.totalorder %s22, 0
    %p222 = por %p220, %p221
    %s224 = sadd.s32 %s223, 1
    %p227 = scmp.eq.s32.totalorder %s16, 1
    %p228 = scmp.ne.s32.totalorder %s223, %s225
    %p229 = scmp.eq.s32.totalorder %s16, 0
    %p230 = por %p228, %p229
    %p231 = scmp.ne.s32.totalorder %s223, %s225
    %p232 = scmp.eq.s32.totalorder %s21, 1
    %p233 = por %p231, %p232
    %p234 = scmp.ne.s32.totalorder %s225, %s226
    %p235 = scmp.eq.s32.totalorder %s21, 0
    %p236 = por %p234, %p235
    %p237 = scmp.ne.s32.totalorder %s225, %s226
    %p238 = scmp.eq.s32.totalorder %s22, 1
    %p239 = por %p237, %p238
    %p241 = scmp.ne.s32.totalorder %s226, %s240
    %p242 = scmp.eq.s32.totalorder %s22, 0
    %p243 = por %p241, %p242
    %s244 = ssub.s32 %s16, %s23
    %p245 = scmp.eq.s32.totalorder %s244, 0
    %s247 = sadd.s32 %s246, 1
    %s248 = scalar_select %p245, %s246, %s247
    %p251 = pneg %p245
    %p252 = scmp.eq.s32.totalorder %s16, 1
    %p253 = por %p251, %p252
    %p254 = scmp.ne.s32.totalorder %s246, %s249
    %p255 = scmp.eq.s32.totalorder %s16, 0
    %p256 = por %p254, %p255
    %p257 = scmp.ne.s32.totalorder %s246, %s249
    %p258 = scmp.eq.s32.totalorder %s21, 1
    %p259 = por %p257, %p258
    %p260 = scmp.ne.s32.totalorder %s249, %s250
    %p261 = scmp.eq.s32.totalorder %s21, 0
    %p262 = por %p260, %p261
    %p263 = scmp.ne.s32.totalorder %s249, %s250
    %p264 = scmp.eq.s32.totalorder %s22, 1
    %p265 = por %p263, %p264
    %p267 = scmp.ne.s32.totalorder %s250, %s266
    %p268 = scmp.eq.s32.totalorder %s22, 0
    %p269 = por %p267, %p268
    %p270 = scmp.le.s32.totalorder 1, %s16
    %p271 = scmp.lt.s32.totalorder %s16, 3
    %p272 = pnand %p270, %p271
    %p273 = pneg %p272
    // Predicated region
    $region9: #{tpu_custom_call.1} parent=5 // pred_check
      _
    $region10: #{tpu_custom_call.1} parent=5 // pred_check_branch
      %275 = sbr.rel (%p272) target = $region12
    $region11: #{tpu_custom_call.1} parent=5 // pred_region
      %s276 = ssub.s32 %s16, 1
      // Predicated region
      $region13: #{tpu_custom_call.1} parent=11 // pred_check
        %p277 = pneg %p89
      $region14: #{tpu_custom_call.1} parent=11 // pred_check_branch
        %279 = sbr.rel (%p277) target = $region16
      $region15: #{tpu_custom_call.1} parent=11 // pred_region
        _
      $region16: #{tpu_custom_call.1} parent=11 // pred_fallthru
        _
      // Predicated region
      $region17: #{tpu_custom_call.1} parent=11 // pred_check
        %p280 = pneg %p110
      $region18: #{tpu_custom_call.1} parent=11 // pred_check_branch
        %282 = sbr.rel (%p280) target = $region20
      $region19: #{tpu_custom_call.1} parent=11 // pred_region
        _
      $region20: #{tpu_custom_call.1} parent=11 // pred_fallthru
        _
      // Predicated region
      $region21: #{tpu_custom_call.1} parent=11 // pred_check
        %p283 = pneg %p131
      $region22: #{tpu_custom_call.1} parent=11 // pred_check_branch
        %285 = sbr.rel (%p283) target = $region24
      $region23: #{tpu_custom_call.1} parent=11 // pred_region
        _
      $region24: #{tpu_custom_call.1} parent=11 // pred_fallthru
        _
      // Predicated region
      $region25: #{tpu_custom_call.1} parent=11 // pred_check
        %p286 = pneg %p152
      $region26: #{tpu_custom_call.1} parent=11 // pred_check_branch
        %288 = sbr.rel (%p286) target = $region28
      $region27: #{tpu_custom_call.1} parent=11 // pred_region
        _
      $region28: #{tpu_custom_call.1} parent=11 // pred_fallthru
        _
      // Predicated region
      $region29: #{tpu_custom_call.1} parent=11 // pred_check
        %p289 = pneg %p173
      $region30: #{tpu_custom_call.1} parent=11 // pred_check_branch
        %291 = sbr.rel (%p289) target = $region32
      $region31: #{tpu_custom_call.1} parent=11 // pred_region
        _
      $region32: #{tpu_custom_call.1} parent=11 // pred_fallthru
        _
      // Predicated region
      $region33: #{tpu_custom_call.1} parent=11 // pred_check
        %p292 = pneg %p194
      $region34: #{tpu_custom_call.1} parent=11 // pred_check_branch
        %294 = sbr.rel (%p292) target = $region36
      $region35: #{tpu_custom_call.1} parent=11 // pred_region
        _
      $region36: #{tpu_custom_call.1} parent=11 // pred_fallthru
        _
      // Predicated region
      $region37: #{tpu_custom_call.1} parent=11 // pred_check
        %p295 = pneg %p215
      $region38: #{tpu_custom_call.1} parent=11 // pred_check_branch
        %297 = sbr.rel (%p295) target = $region40
      $region39: #{tpu_custom_call.1} parent=11 // pred_region
        _
      $region40: #{tpu_custom_call.1} parent=11 // pred_fallthru
        _
      // Predicated region
      $region41: #{tpu_custom_call.1} parent=11 // pred_check
        %p298 = pneg %p236
      $region42: #{tpu_custom_call.1} parent=11 // pred_check_branch
        %300 = sbr.rel (%p298) target = $region44
      $region43: #{tpu_custom_call.1} parent=11 // pred_region
        _
      $region44: #{tpu_custom_call.1} parent=11 // pred_fallthru
        _
    $region12: #{tpu_custom_call.1} parent=5 // pred_fallthru
      _
    %p301 = scmp.lt.s32.totalorder %s16, 2
    // Predicated region
    $region45: #{tpu_custom_call.1} parent=5 // pred_check
      %p302 = pneg %p301
    $region46: #{tpu_custom_call.1} parent=5 // pred_check_branch
      %304 = sbr.rel (%p302) target = $region48
    $region47: #{tpu_custom_call.1} parent=5 // pred_region
      // Predicated region
      $region49: #{tpu_custom_call.1} parent=47 // pred_check
        %p305 = pneg %p36
      $region50: #{tpu_custom_call.1} parent=47 // pred_check_branch
        %307 = sbr.rel (%p305) target = $region52
      $region51: #{tpu_custom_call.1} parent=47 // pred_region
        %p308 = scmp.lt.s32.totalorder %s16, 1
        %s309 = scalar_select %p308, %s16, 1
        %s310 = smul.addr %s309, 4
        %s311 = smul.addr %s310, 8
        %s312 = scalar_lea.vmem %s0, %s311
      $region52: #{tpu_custom_call.1} parent=47 // pred_fallthru
        _
      // Predicated region
      $region53: #{tpu_custom_call.1} parent=47 // pred_check
        %p313 = pneg %p62
      $region54: #{tpu_custom_call.1} parent=47 // pred_check_branch
        %315 = sbr.rel (%p313) target = $region56
      $region55: #{tpu_custom_call.1} parent=47 // pred_region
        %p316 = scmp.lt.s32.totalorder %s16, 1
        %s317 = scalar_select %p316, %s16, 1
        %s318 = smul.addr %s317, 4
        %s319 = smul.addr %s318, 8
        %s320 = scalar_lea.vmem %s1, %s319
      $region56: #{tpu_custom_call.1} parent=47 // pred_fallthru
        _
    $region48: #{tpu_custom_call.1} parent=5 // pred_fallthru
      _
    %p321 = scmp.le.s32.totalorder 1, %s16
    %p322 = scmp.lt.s32.totalorder %s16, 3
    %p323 = pnand %p321, %p322
    %p324 = pneg %p323
    // Predicated region
    $region57: #{tpu_custom_call.1} parent=5 // pred_check
      _
    $region58: #{tpu_custom_call.1} parent=5 // pred_check_branch
      %326 = sbr.rel (%p323) target = $region60
    $region59: #{tpu_custom_call.1} parent=5 // pred_region
      %s327 = ssub.s32 %s16, 1
      %p328 = scmp.lt.s32.totalorder %s21, 1
      %s329 = scalar_select %p328, %s21, 1
      %s330 = smul.addr %s329, 4
      %s331 = smul.addr %s330, 8
      %s332 = scalar_lea.vmem %s0, %s331
      %p333 = pneg %p42
      %p334 = pneg %p39
      %p335 = scmp.lt.s32.totalorder %s21, 1
      %s336 = scalar_select %p335, %s21, 1
      %s337 = smul.addr %s336, 4
      %s338 = smul.addr %s337, 8
      %s339 = scalar_lea.vmem %s1, %s338
      %p340 = pneg %p68
      %p341 = pneg %p65
      %p342 = pneg %p89
      %p343 = pneg %p86
      %p344 = pneg %p110
      %p345 = pneg %p107
      %p346 = pneg %p131
      %p347 = pneg %p128
      %p348 = pneg %p152
      %p349 = pneg %p149
      %p350 = pneg %p173
      %p351 = pneg %p170
      %p352 = pneg %p194
      %p353 = pneg %p191
      %p354 = pneg %p215
      %p355 = pneg %p212
      %p356 = pneg %p236
      %p357 = pneg %p233
      %p358 = pneg %p262
      %p359 = pneg %p259
      %p360 = scmp.lt.s32.totalorder %s21, 1
      %s361 = scalar_select %p360, %s21, 1
      %s362 = smul.addr %s361, 4
      %s363 = smul.addr %s362, 8
      %s364 = scalar_lea.vmem %s10, %s363
      %p365 = scmp.lt.s32.totalorder %s21, 1
      %s366 = scalar_select %p365, %s21, 1
      %s367 = smul.addr %s366, 4
      %s368 = smul.addr %s367, 8
      %s369 = scalar_lea.vmem %s0, %s368
      %p370 = scmp.lt.s32.totalorder %s21, 1
      %s371 = scalar_select %p370, %s21, 1
      %s372 = smul.addr %s371, 4
      %s373 = smul.addr %s372, 8
      %s374 = scalar_lea.vmem %s1, %s373
      %p375 = scmp.lt.s32.totalorder %s21, 1
      %s376 = scalar_select %p375, %s21, 1
      %s377 = smul.addr %s376, 4
      %s378 = smul.addr %s377, 8
      %s379 = scalar_lea.vmem %s10, %s378
      %v381 = vld [vmem:[%s2] sm:$0xf]
      %v382 = vld [vmem:[%s2 + $0x4] sm:$0xf]
      %v383 = vld [vmem:[%s2 + $0x8] sm:$0xf]
      %v384 = vld [vmem:[%s2 + $0xc] sm:$0xf]
      %v385 = vld [vmem:[%s2 + $0x10] sm:$0xf]
      %v386 = vld [vmem:[%s2 + $0x14] sm:$0xf]
      %v387 = vld [vmem:[%s2 + $0x18] sm:$0xf]
      %v388 = vld [vmem:[%s2 + $0x1c] sm:$0xf]
      %v389 = vld [vmem:[%s3] sm:$0xff]
      %v390 = vld [vmem:[%s3 + $0x8] sm:$0xff]
      %v391 = vld [vmem:[%s3 + $0x10] sm:$0xff]
      %v392 = vld [vmem:[%s3 + $0x18] sm:$0xff]
      %v393 = vld [vmem:[%s3 + $0x20] sm:$0xff]
      %v394 = vld [vmem:[%s3 + $0x28] sm:$0xff]
      %v395 = vld [vmem:[%s3 + $0x30] sm:$0xff]
      %v396 = vld [vmem:[%s3 + $0x38] sm:$0xff]
      %v397 = vld [vmem:[%s4] sm:$0xf]
      %v398 = vld [vmem:[%s4 + $0x4] sm:$0xf]
      %v399 = vld [vmem:[%s4 + $0x8] sm:$0xf]
      %v400 = vld [vmem:[%s4 + $0xc] sm:$0xf]
      %v401 = vld [vmem:[%s5] sm:$0xff]
      %v402 = vld [vmem:[%s5 + $0x8] sm:$0xff]
      %v403 = vld [vmem:[%s5 + $0x10] sm:$0xff]
      %v404 = vld [vmem:[%s5 + $0x18] sm:$0xff]
      %v405 = vld [vmem:[%s6] sm:$0xf]
      %v406 = vld [vmem:[%s6 + $0x4] sm:$0xf]
      %v407 = vld [vmem:[%s6 + $0x8] sm:$0xf]
      %v408 = vld [vmem:[%s6 + $0xc] sm:$0xf]
      %v409 = vld [vmem:[%s7] sm:$0xff]
      %v410 = vld [vmem:[%s7 + $0x8] sm:$0xff]
      %v411 = vld [vmem:[%s7 + $0x10] sm:$0xff]
      %v412 = vld [vmem:[%s7 + $0x18] sm:$0xff]
      %v413 = vld [vmem:[%s8] sm:$0xff]
      %v414 = vld [vmem:[%s8 + $0x8] sm:$0xff]
      %v415 = vld [vmem:[%s8 + $0x10] sm:$0xff]
      %v416 = vld [vmem:[%s8 + $0x18] sm:$0xff]
      %v417 = vld [vmem:[%s9] sm:$0xff]
      %v418 = vld [vmem:[%s9 + $0x8] sm:$0xff]
      %v419 = vld [vmem:[%s9 + $0x10] sm:$0xff]
      %v420 = vld [vmem:[%s9 + $0x18] sm:$0xff]
      %v421 = vld [vmem:[%s369] sm:$0xff]
      %v422 = vld [vmem:[%s369 + $0x8] sm:$0xff]
      %v423 = vld [vmem:[%s369 + $0x10] sm:$0xff]
      %v424 = vld [vmem:[%s369 + $0x18] sm:$0xff]
      %v425 = vpack.c.bf16 %v422, %v421
      %v426 = vpack.c.bf16 %v424, %v423
      %v427 = vld [vmem:[%s374] sm:$0xff]
      %v428 = vld [vmem:[%s374 + $0x8] sm:$0xff]
      %v429 = vld [vmem:[%s374 + $0x10] sm:$0xff]
      %v430 = vld [vmem:[%s374 + $0x18] sm:$0xff]
      %v431 = vpack.c.bf16 %v428, %v427
      %v432 = vpack.c.bf16 %v430, %v429
      %434 = vset.pattern.permute.xlu0 0
      %435 = vperm.xlu0 %434, %v389
      %v436 = vpop.permute.xlu0 %435
      %439 = vset.pattern.permute.xlu0 0
      %440 = vperm.xlu0 %439, %v390
      %v441 = vpop.permute.xlu0 %440
      %444 = vset.pattern.permute.xlu0 0
      %445 = vperm.xlu0 %444, %v391
      %v446 = vpop.permute.xlu0 %445
      %449 = vset.pattern.permute.xlu0 0
      %450 = vperm.xlu0 %449, %v392
      %v451 = vpop.permute.xlu0 %450
      %454 = vset.pattern.permute.xlu0 0
      %455 = vperm.xlu0 %454, %v393
      %v456 = vpop.permute.xlu0 %455
      %459 = vset.pattern.permute.xlu0 0
      %460 = vperm.xlu0 %459, %v394
      %v461 = vpop.permute.xlu0 %460
      %464 = vset.pattern.permute.xlu0 0
      %465 = vperm.xlu0 %464, %v395
      %v466 = vpop.permute.xlu0 %465
      %469 = vset.pattern.permute.xlu0 0
      %470 = vperm.xlu0 %469, %v396
      %v471 = vpop.permute.xlu0 %470
      %v481 = vunpack.c.l.b16 %v381
      %v482 = vunpack.c.l.b16 %v382
      %v483 = vunpack.c.l.b16 %v383
      %v484 = vunpack.c.l.b16 %v384
      %v485 = vunpack.c.l.b16 %v385
      %v486 = vunpack.c.l.b16 %v386
      %v487 = vunpack.c.l.b16 %v387
      %v488 = vunpack.c.l.b16 %v388
      %v489 = vpack.c.b16 %v482, %v481
      %v490 = vpack.c.b16 %v484, %v483
      %v491 = vpack.c.b16 %v486, %v485
      %v492 = vpack.c.b16 %v488, %v487
      %vm493 = vcmask 261120
      %v495 = vsel %vm493, %v489, 0
      %v498 = vsel %vm493, %v490, 0
      %v501 = vsel %vm493, %v491, 0
      %v504 = vsel %vm493, %v492, 0
      %506 = vmatpush.bf16.msra.mxu0 0
      %507 = vmatpush.bf16.msra.mxu0 0
      %508 = vmatpush.bf16.msra.mxu0 0
      %509 = vmatpush.bf16.msra.mxu0 0
      %510 = vmatpush.bf16.msra.mxu0 0
      %511 = vmatpush.bf16.msra.mxu0 0
      %512 = vmatpush.bf16.msra.mxu0 %v426
      %513 = vmatpush.bf16.msra.mxu0 %v425
      %514 = vmatmul.bf16.gmra.mxu0 %v495
      %v515 = vpop.f32.mrf.mxu0
      %v516 = vadd.f32 %v436, %v515
      %v517 = vpop.f32.mrf.mxu0
      %v518 = vadd.f32 %v441, %v517
      %519 = vmatmul.bf16.gmra.mxu0 %v498
      %v520 = vpop.f32.mrf.mxu0
      %v521 = vadd.f32 %v446, %v520
      %v522 = vpop.f32.mrf.mxu0
      %v523 = vadd.f32 %v451, %v522
      %524 = vmatmul.bf16.gmra.mxu0 %v501
      %v525 = vpop.f32.mrf.mxu0
      %v526 = vadd.f32 %v456, %v525
      %v527 = vpop.f32.mrf.mxu0
      %v528 = vadd.f32 %v461, %v527
      %529 = vmatmul.bf16.gmra.mxu0 %v504
      %v530 = vpop.f32.mrf.mxu0
      %v531 = vadd.f32 %v466, %v530
      %v532 = vpop.f32.mrf.mxu0
      %v533 = vadd.f32 %v471, %v532
      %534 = vdwg.mxu0
      %536 = vset.pattern.permute.xlu0 0
      %537 = vperm.xlu0 %536, %v401
      %v538 = vpop.permute.xlu0 %537
      %541 = vset.pattern.permute.xlu0 0
      %542 = vperm.xlu0 %541, %v402
      %v543 = vpop.permute.xlu0 %542
      %546 = vset.pattern.permute.xlu0 0
      %547 = vperm.xlu0 %546, %v403
      %v548 = vpop.permute.xlu0 %547
      %551 = vset.pattern.permute.xlu0 0
      %552 = vperm.xlu0 %551, %v404
      %v553 = vpop.permute.xlu0 %552
      %v559 = vunpack.c.l.b16 %v397
      %v560 = vunpack.c.l.b16 %v398
      %v561 = vunpack.c.l.b16 %v399
      %v562 = vunpack.c.l.b16 %v400
      %v563 = vpack.c.b16 %v560, %v559
      %v564 = vpack.c.b16 %v562, %v561
      %v566 = vsel %vm493, %v563, 0
      %v569 = vsel %vm493, %v564, 0
      %571 = vmatpush.bf16.msra.mxu0 0
      %572 = vmatpush.bf16.msra.mxu0 0
      %573 = vmatpush.bf16.msra.mxu0 0
      %574 = vmatpush.bf16.msra.mxu0 0
      %575 = vmatpush.bf16.msra.mxu0 0
      %576 = vmatpush.bf16.msra.mxu0 0
      %577 = vmatpush.bf16.msra.mxu0 %v432
      %578 = vmatpush.bf16.msra.mxu0 %v431
      %579 = vmatmul.bf16.gmra.mxu0 %v566
      %v580 = vpop.f32.mrf.mxu0
      %v581 = vadd.f32 %v538, %v580
      %v582 = vpop.f32.mrf.mxu0
      %v583 = vadd.f32 %v543, %v582
      %584 = vmatmul.bf16.gmra.mxu0 %v569
      %v585 = vpop.f32.mrf.mxu0
      %v586 = vadd.f32 %v548, %v585
      %v587 = vpop.f32.mrf.mxu0
      %v588 = vadd.f32 %v553, %v587
      %589 = vdwg.mxu0
      %v590 = vpack.c.bf16 %v528, %v526
      %v591 = vpack.c.bf16 %v533, %v531
      %v592 = vmul.f32 %v581, %v581
      %v593 = vmul.f32 %v583, %v583
      %v594 = vmul.f32 %v586, %v586
      %v595 = vmul.f32 %v588, %v588
      %vm596 = vcmask 130048
      %v597 = vsel %vm596, %v592, 0.0
      %598 = vadd.xlane.f32.xlu0 %v597
      %v599 = vpop.xlane.xlu0 %598
      %v600 = vsel %vm596, %v593, 0.0
      %601 = vadd.xlane.f32.xlu0 %v600
      %v602 = vpop.xlane.xlu0 %601
      %v603 = vsel %vm596, %v594, 0.0
      %604 = vadd.xlane.f32.xlu0 %v603
      %v605 = vpop.xlane.xlu0 %604
      %v606 = vsel %vm596, %v595, 0.0
      %607 = vadd.xlane.f32.xlu0 %v606
      %v608 = vpop.xlane.xlu0 %607
      %v609 = vmax.f32 %v599, 1e-24
      %v610 = vmax.f32 %v602, 1e-24
      %v611 = vmax.f32 %v605, 1e-24
      %v612 = vmax.f32 %v608, 1e-24
      %v613 = vrsqrt.pop %v609
      %v614 = vmul.f32 %v613, %v609
      %v615 = vmul.f32 %v614, %v613
      %v616 = vmul.f32 0.5, %v615
      %v617 = vsub.f32 1.5, %v616
      %v618 = vmul.f32 %v613, %v617
      %vm619 = vweird.f32 %v609
      %vm620 = vweird.f32 %v613
      %vm621 = vmor %vm619, %vm620
      %v622 = vsel %vm621, %v613, %v618
      %v623 = vrsqrt.pop %v610
      %v624 = vmul.f32 %v623, %v610
      %v625 = vmul.f32 %v624, %v623
      %v626 = vmul.f32 0.5, %v625
      %v627 = vsub.f32 1.5, %v626
      %v628 = vmul.f32 %v623, %v627
      %vm629 = vweird.f32 %v610
      %vm630 = vweird.f32 %v623
      %vm631 = vmor %vm629, %vm630
      %v632 = vsel %vm631, %v623, %v628
      %v633 = vrsqrt.pop %v611
      %v634 = vmul.f32 %v633, %v611
      %v635 = vmul.f32 %v634, %v633
      %v636 = vmul.f32 0.5, %v635
      %v637 = vsub.f32 1.5, %v636
      %v638 = vmul.f32 %v633, %v637
      %vm639 = vweird.f32 %v611
      %vm640 = vweird.f32 %v633
      %vm641 = vmor %vm639, %vm640
      %v642 = vsel %vm641, %v633, %v638
      %v643 = vrsqrt.pop %v612
      %v644 = vmul.f32 %v643, %v612
      %v645 = vmul.f32 %v644, %v643
      %v646 = vmul.f32 0.5, %v645
      %v647 = vsub.f32 1.5, %v646
      %v648 = vmul.f32 %v643, %v647
      %vm649 = vweird.f32 %v612
      %vm650 = vweird.f32 %v643
      %vm651 = vmor %vm649, %vm650
      %v652 = vsel %vm651, %v643, %v648
      %v653 = vmul.f32 %v581, %v622
      %v654 = vmul.f32 %v583, %v632
      %v655 = vmul.f32 %v586, %v642
      %v656 = vmul.f32 %v588, %v652
      %658 = vset.pattern.permute.xlu0 0
      %659 = vperm.xlu0 %658, %v413
      %v660 = vpop.permute.xlu0 %659
      %663 = vset.pattern.permute.xlu0 0
      %664 = vperm.xlu0 %663, %v414
      %v665 = vpop.permute.xlu0 %664
      %668 = vset.pattern.permute.xlu0 0
      %669 = vperm.xlu0 %668, %v415
      %v670 = vpop.permute.xlu0 %669
      %673 = vset.pattern.permute.xlu0 0
      %674 = vperm.xlu0 %673, %v416
      %v675 = vpop.permute.xlu0 %674
      %v677 = vmul.f32 %v653, %v660
      %v678 = vmul.f32 %v654, %v665
      %v679 = vmul.f32 %v655, %v670
      %v680 = vmul.f32 %v656, %v675
      %v681 = vmul.f32 %v516, %v516
      %v682 = vmul.f32 %v518, %v518
      %v683 = vmul.f32 %v521, %v521
      %v684 = vmul.f32 %v523, %v523
      %v685 = vsel %vm596, %v681, 0.0
      %686 = vadd.xlane.f32.xlu0 %v685
      %v687 = vpop.xlane.xlu0 %686
      %v688 = vsel %vm596, %v682, 0.0
      %689 = vadd.xlane.f32.xlu0 %v688
      %v690 = vpop.xlane.xlu0 %689
      %v691 = vsel %vm596, %v683, 0.0
      %692 = vadd.xlane.f32.xlu0 %v691
      %v693 = vpop.xlane.xlu0 %692
      %v694 = vsel %vm596, %v684, 0.0
      %695 = vadd.xlane.f32.xlu0 %v694
      %v696 = vpop.xlane.xlu0 %695
      %v697 = vmax.f32 %v687, 1e-24
      %v698 = vmax.f32 %v690, 1e-24
      %v699 = vmax.f32 %v693, 1e-24
      %v700 = vmax.f32 %v696, 1e-24
      %v701 = vrsqrt.pop %v697
      %v702 = vmul.f32 %v701, %v697
      %v703 = vmul.f32 %v702, %v701
      %v704 = vmul.f32 0.5, %v703
      %v705 = vsub.f32 1.5, %v704
      %v706 = vmul.f32 %v701, %v705
      %vm707 = vweird.f32 %v697
      %vm708 = vweird.f32 %v701
      %vm709 = vmor %vm707, %vm708
      %v710 = vsel %vm709, %v701, %v706
      %v711 = vrsqrt.pop %v698
      %v712 = vmul.f32 %v711, %v698
      %v713 = vmul.f32 %v712, %v711
      %v714 = vmul.f32 0.5, %v713
      %v715 = vsub.f32 1.5, %v714
      %v716 = vmul.f32 %v711, %v715
      %vm717 = vweird.f32 %v698
      %vm718 = vweird.f32 %v711
      %vm719 = vmor %vm717, %vm718
      %v720 = vsel %vm719, %v711, %v716
      %v721 = vrsqrt.pop %v699
      %v722 = vmul.f32 %v721, %v699
      %v723 = vmul.f32 %v722, %v721
      %v724 = vmul.f32 0.5, %v723
      %v725 = vsub.f32 1.5, %v724
      %v726 = vmul.f32 %v721, %v725
      %vm727 = vweird.f32 %v699
      %vm728 = vweird.f32 %v721
      %vm729 = vmor %vm727, %vm728
      %v730 = vsel %vm729, %v721, %v726
      %v731 = vrsqrt.pop %v700
      %v732 = vmul.f32 %v731, %v700
      %v733 = vmul.f32 %v732, %v731
      %v734 = vmul.f32 0.5, %v733
      %v735 = vsub.f32 1.5, %v734
      %v736 = vmul.f32 %v731, %v735
      %vm737 = vweird.f32 %v700
      %vm738 = vweird.f32 %v731
      %vm739 = vmor %vm737, %vm738
      %v740 = vsel %vm739, %v731, %v736
      %v741 = vmul.f32 %v516, %v710
      %v742 = vmul.f32 %v518, %v720
      %v743 = vmul.f32 %v521, %v730
      %v744 = vmul.f32 %v523, %v740
      %v745 = vpack.c.bf16 %v678, %v677
      %v746 = vpack.c.bf16 %v680, %v679
      %v747 = vpack.c.bf16 %v742, %v741
      %v748 = vpack.c.bf16 %v744, %v743
      %v750 = vsel %vm596, %v745, 0
      %v753 = vsel %vm596, %v746, 0
      %v756 = vsel %vm596, %v747, 0
      %v759 = vsel %vm596, %v748, 0
      %761 = vmatpush.bf16.xpose.msra.mxu0 0
      %762 = vmatpush.bf16.xpose.msra.mxu0 0
      %763 = vmatpush.bf16.xpose.msra.mxu0 0
      %764 = vmatpush.bf16.xpose.msra.mxu0 0
      %765 = vmatpush.bf16.xpose.msra.mxu0 0
      %766 = vmatpush.bf16.xpose.msra.mxu0 0
      %767 = vmatpush.bf16.xpose.msra.mxu0 %v759
      %768 = vmatpush.bf16.xpose.msra.mxu0 %v756
      %769 = vmatmul.bf16.gmra.mxu0 %v750
      %v770 = vpop.f32.mrf.mxu0
      %v771 = vadd.f32 %v417, %v770
      %v772 = vpop.f32.mrf.mxu0
      %v773 = vadd.f32 %v418, %v772
      %774 = vmatmul.bf16.gmra.mxu0 %v753
      %v775 = vpop.f32.mrf.mxu0
      %v776 = vadd.f32 %v419, %v775
      %v777 = vpop.f32.mrf.mxu0
      %v778 = vadd.f32 %v420, %v777
      %779 = vdwg.mxu0
      %v780 = vsel %vm493, %v771, -inf
      %781 = vmax.xlane.f32.xlu0 %v780
      %v782 = vpop.xlane.xlu0 %781
      %v783 = vsel %vm493, %v773, -inf
      %784 = vmax.xlane.f32.xlu0 %v783
      %v785 = vpop.xlane.xlu0 %784
      %v786 = vsel %vm493, %v776, -inf
      %787 = vmax.xlane.f32.xlu0 %v786
      %v788 = vpop.xlane.xlu0 %787
      %v789 = vsel %vm493, %v778, -inf
      %790 = vmax.xlane.f32.xlu0 %v789
      %v791 = vpop.xlane.xlu0 %790
      %v792 = vsub.f32 %v771, %v782
      %v793 = vsub.f32 %v773, %v785
      %v794 = vsub.f32 %v776, %v788
      %v795 = vsub.f32 %v778, %v791
      %v796 = vmul.f32 %v792, 1.442695
      %v797 = vpow.pop %v796
      %v798 = vmul.f32 %v793, 1.442695
      %v799 = vpow.pop %v798
      %v800 = vmul.f32 %v794, 1.442695
      %v801 = vpow.pop %v800
      %v802 = vmul.f32 %v795, 1.442695
      %v803 = vpow.pop %v802
      %v804 = vsel %vm493, %v797, 0.0
      %805 = vadd.xlane.f32.xlu0 %v804
      %v806 = vpop.xlane.xlu0 %805
      %v807 = vsel %vm493, %v799, 0.0
      %808 = vadd.xlane.f32.xlu0 %v807
      %v809 = vpop.xlane.xlu0 %808
      %v810 = vsel %vm493, %v801, 0.0
      %811 = vadd.xlane.f32.xlu0 %v810
      %v812 = vpop.xlane.xlu0 %811
      %v813 = vsel %vm493, %v803, 0.0
      %814 = vadd.xlane.f32.xlu0 %v813
      %v815 = vpop.xlane.xlu0 %814
      %v816 = vpack.c.bf16 %v799, %v797
      %v817 = vpack.c.bf16 %v803, %v801
      %v819 = vsel %vm493, %v816, 0
      %v822 = vsel %vm493, %v817, 0
      %824 = vmatpush.bf16.msra.mxu0 0
      %825 = vmatpush.bf16.msra.mxu0 0
      %826 = vmatpush.bf16.msra.mxu0 0
      %827 = vmatpush.bf16.msra.mxu0 0
      %828 = vmatpush.bf16.msra.mxu0 0
      %829 = vmatpush.bf16.msra.mxu0 0
      %830 = vmatpush.bf16.msra.mxu0 %v591
      %831 = vmatpush.bf16.msra.mxu0 %v590
      %832 = vmatmul.bf16.gmra.mxu0 %v819
      %v833 = vpop.f32.mrf.mxu0
      %v834 = vadd.f32 0.0, %v833
      %v835 = vpop.f32.mrf.mxu0
      %v836 = vadd.f32 0.0, %v835
      %837 = vmatmul.bf16.gmra.mxu0 %v822
      %v838 = vpop.f32.mrf.mxu0
      %v839 = vadd.f32 0.0, %v838
      %v840 = vpop.f32.mrf.mxu0
      %v841 = vadd.f32 0.0, %v840
      %842 = vdwg.mxu0
      %v843 = vrcp.pop %v806
      %v844 = vrcp.pop %v809
      %v845 = vrcp.pop %v812
      %v846 = vrcp.pop %v815
      %v847 = vmul.f32 %v834, %v843
      %v848 = vmul.f32 %v836, %v844
      %v849 = vmul.f32 %v839, %v845
      %v850 = vmul.f32 %v841, %v846
      %v851 = vpack.c.bf16 %v848, %v847
      %v852 = vpack.c.bf16 %v850, %v849
      %854 = vset.pattern.permute.xlu0 0
      %855 = vperm.xlu0 %854, %v409
      %v856 = vpop.permute.xlu0 %855
      %859 = vset.pattern.permute.xlu0 0
      %860 = vperm.xlu0 %859, %v410
      %v861 = vpop.permute.xlu0 %860
      %864 = vset.pattern.permute.xlu0 0
      %865 = vperm.xlu0 %864, %v411
      %v866 = vpop.permute.xlu0 %865
      %869 = vset.pattern.permute.xlu0 0
      %870 = vperm.xlu0 %869, %v412
      %v871 = vpop.permute.xlu0 %870
      %v877 = vunpack.c.l.b16 %v405
      %v878 = vunpack.c.l.b16 %v406
      %v879 = vunpack.c.l.b16 %v407
      %v880 = vunpack.c.l.b16 %v408
      %v881 = vpack.c.b16 %v878, %v877
      %v882 = vpack.c.b16 %v880, %v879
      %v884 = vsel %vm493, %v881, 0
      %v887 = vsel %vm493, %v882, 0
      %889 = vmatpush.bf16.msra.mxu0 0
      %890 = vmatpush.bf16.msra.mxu0 0
      %891 = vmatpush.bf16.msra.mxu0 0
      %892 = vmatpush.bf16.msra.mxu0 0
      %893 = vmatpush.bf16.msra.mxu0 0
      %894 = vmatpush.bf16.msra.mxu0 0
      %895 = vmatpush.bf16.msra.mxu0 %v852
      %896 = vmatpush.bf16.msra.mxu0 %v851
      %897 = vmatmul.bf16.gmra.mxu0 %v884
      %v898 = vpop.f32.mrf.mxu0
      %v899 = vadd.f32 %v856, %v898
      %v900 = vpop.f32.mrf.mxu0
      %v901 = vadd.f32 %v861, %v900
      %902 = vmatmul.bf16.gmra.mxu0 %v887
      %v903 = vpop.f32.mrf.mxu0
      %v904 = vadd.f32 %v866, %v903
      %v905 = vpop.f32.mrf.mxu0
      %v906 = vadd.f32 %v871, %v905
      %907 = vdwg.mxu0
      %908 = vst.msk [vmem:[%s379] sm:$0xff] %vm596, %v899
      %909 = vst.msk [vmem:[%s379 + $0x8] sm:$0xff] %vm596, %v901
      %910 = vst.msk [vmem:[%s379 + $0x10] sm:$0xff] %vm596, %v904
      %911 = vst.msk [vmem:[%s379 + $0x18] sm:$0xff] %vm596, %v906
      %p912 = scmp.lt.s32.totalorder %s21, 1
      %s913 = scalar_select %p912, %s21, 1
      %s914 = smul.addr %s913, 4
      %s915 = smul.addr %s914, 8
      %s916 = scalar_lea.vmem %s10, %s915
      // Predicated region
      $region61: #{tpu_custom_call.1} parent=59 // pred_check
        %p917 = pneg %p259
      $region62: #{tpu_custom_call.1} parent=59 // pred_check_branch
        %919 = sbr.rel (%p917) target = $region64
      $region63: #{tpu_custom_call.1} parent=59 // pred_region
        _
      $region64: #{tpu_custom_call.1} parent=59 // pred_fallthru
        _
    $region60: #{tpu_custom_call.1} parent=5 // pred_fallthru
      _
    %p920 = scmp.le.s32.totalorder 2, %s16
    // Predicated region
    $region65: #{tpu_custom_call.1} parent=5 // pred_check
      %p921 = pneg %p920
    $region66: #{tpu_custom_call.1} parent=5 // pred_check_branch
      %923 = sbr.rel (%p921) target = $region68
    $region67: #{tpu_custom_call.1} parent=5 // pred_region
      %s924 = ssub.s32 %s16, 2
      // Predicated region
      $region69: #{tpu_custom_call.1} parent=67 // pred_check
        %p925 = pneg %p265
      $region70: #{tpu_custom_call.1} parent=67 // pred_check_branch
        %927 = sbr.rel (%p925) target = $region72
      $region71: #{tpu_custom_call.1} parent=67 // pred_region
        %p928 = scmp.lt.s32.totalorder %s22, 1
        %s929 = scalar_select %p928, %s22, 1
        %s930 = smul.addr %s929, 4
        %s931 = smul.addr %s930, 8
        %s932 = scalar_lea.vmem %s10, %s931
      $region72: #{tpu_custom_call.1} parent=67 // pred_fallthru
        _
    $region68: #{tpu_custom_call.1} parent=5 // pred_fallthru
      _
  $region6: #{tpu_custom_call.1} parent=0 // loop_footer
    %s20 = sadd.s32 1, %s16
  $region7: #{tpu_custom_call.1} parent=0 // loop_footer_branch
    %15 = sbr.rel target = $region3
  $region8: #{tpu_custom_call.1} parent=0 // loop_exit
    _

</llo_original>
